<compile_context>
chip_gen: v6e
topology: v6e:2x2x1
jax: 0.10.0
libtpu: 0.0.40
codegen_flags: <defaults>
</compile_context>

<pallas_src>
import functools
import math

import jax
import jax.numpy as jnp
from jax.experimental import pallas as pl
from jax.experimental.pallas import tpu as pltpu

EPS = 1e-5  # PyTorch LayerNorm default eps


def _layernorm(x, g, b):
    mu = jnp.mean(x, axis=-1, keepdims=True)
    var = jnp.mean((x - mu) ** 2, axis=-1, keepdims=True)  # population variance
    return (x - mu) * jax.lax.rsqrt(var + EPS) * g + b


def cross_attention_kernel(
    text_ref,     # (T, Dt)  row tile of flattened (B*S, Dt) text
    vis_ref,      # (B, Dv)  vision features for all batches (grid-invariant)
    wc_ref,       # (Dv, Dt) composed value->in_proj_v->out_proj weight
    consts_ref,   # (3, Dt)  [composed bias; LN gamma; LN beta]
    out_ref,      # (T, Dt)
    *, seq_len,
):
    t = text_ref[...].astype(jnp.float32)                      # (T, Dt)
    T, _ = t.shape
    B = vis_ref.shape[0]

    consts = consts_ref[...].astype(jnp.float32)               # (3, Dt)
    bc = consts[0:1, :]
    gamma = consts[1:2, :]
    beta = consts[2:3, :]

    # Attention output per batch element.  With a single key the softmax
    # weight is exactly 1.0 for every head, so the attention output is just
    # the (folded) value projection of the vision token, broadcast over S.
    attn_b = (
        jnp.dot(vis_ref[...], wc_ref[...], preferred_element_type=jnp.float32)
        + bc
    )                                                           # (B, Dt)

    # Map each text row of this tile to its batch's attention row via a
    # one-hot matmul (MXU) - no gather, no integer division.
    row0 = pl.program_id(0) * T
    rows = jax.lax.broadcasted_iota(jnp.int32, (T, B), 0) + row0
    cols = jax.lax.broadcasted_iota(jnp.int32, (T, B), 1)
    lo = cols * seq_len
    onehot = jnp.logical_and(rows >= lo, rows < lo + seq_len).astype(jnp.float32)
    attn = jnp.dot(onehot, attn_b, preferred_element_type=jnp.float32)  # (T, Dt)

    # Residual (eval-mode dropout = identity) + LayerNorm.
    y = t + attn
    out = _layernorm(y, gamma, beta)
    out_ref[...] = out.astype(out_ref.dtype)


def _pick_row_tile(total_rows, max_tile=512):
    """Largest row tile <= max_tile that divides total_rows and keeps the
    sublane dim (8,)-aligned (or is the full array)."""
    if total_rows <= max_tile:
        return total_rows
    t = (max_tile // 8) * 8
    while t >= 8:
        if total_rows % t == 0:
            return t
        t -= 8
    return total_rows  # fallback: single block


def cross_attention_layer(text_features, vision_features, params, *, num_heads,
                          max_row_tile=512):
    """Pallas forward pass of CrossAttentionLayer (inference)."""
    B, S, Dt = text_features.shape
    Dv = vision_features.shape[-1]
    assert Dt % num_heads == 0
    dtype = text_features.dtype  # module casts everything to the text dtype

    # ---- one-time host-side weight constant-folding (f32 for accuracy) ----
    # softmax over a single key == 1.0, so only the value chain survives:
    #   attn_row = ((vision @ Wv + bv) @ Wv_in + bv_in) @ Wo + bo
    f32 = lambda a: jnp.asarray(a, jnp.float32)
    wc = f32(params["wv"]) @ f32(params["wv_in"]) @ f32(params["wo"])       # (Dv, Dt)
    bc = (f32(params["bv"]) @ f32(params["wv_in"]) + f32(params["bv_in"])) \
         @ f32(params["wo"]) + f32(params["bo"])                            # (Dt,)

    consts = jnp.stack([bc, f32(params["ln_g"]), f32(params["ln_b"])], axis=0)

    wc = wc.astype(dtype)
    consts = consts.astype(dtype)
    vis = vision_features.astype(dtype)

    # ---- fuse batch & sequence into one row axis, tile rows on the grid ----
    total_rows = B * S
    tile = _pick_row_tile(total_rows, max_row_tile)
    grid = (total_rows // tile,)
    text2d = text_features.reshape(total_rows, Dt)

    kernel = functools.partial(cross_attention_kernel, seq_len=S)

    out = pl.pallas_call(
        kernel,
        out_shape=jax.ShapeDtypeStruct((total_rows, Dt), dtype),
        grid=grid,
        in_specs=[
            pl.BlockSpec((tile, Dt), lambda i: (i, 0)),   # text row tile
            pl.BlockSpec((B, Dv), lambda i: (0, 0)),      # vision (grid-invariant)
            pl.BlockSpec((Dv, Dt), lambda i: (0, 0)),     # composed weight
            pl.BlockSpec((3, Dt), lambda i: (0, 0)),      # packed bias/gamma/beta
        ],
        out_specs=pl.BlockSpec((tile, Dt), lambda i: (i, 0)),
        compiler_params=pltpu.CompilerParams(
            dimension_semantics=("parallel",),
        ),
    )(text2d, vis, wc, consts)
    return out.reshape(B, S, Dt)


def reference(text_features, vision_features, params, *, num_heads):
    """Pure-JAX replica of the full PyTorch forward (eval mode), q/k path
    included, for correctness checking."""
    t = text_features.astype(jnp.float32)
    vis = vision_features.astype(jnp.float32)[:, None, :]          # (B, 1, Dv)
    B, S, Dt = t.shape
    dh = Dt // num_heads

    q = t @ params["wq"] + params["bq"]
    k = vis @ params["wk"] + params["bk"]
    v = vis @ params["wv"] + params["bv"]
    q = q @ params["wq_in"] + params["bq_in"]
    k = k @ params["wk_in"] + params["bk_in"]
    v = v @ params["wv_in"] + params["bv_in"]

    qh = q.reshape(B, S, num_heads, dh).transpose(0, 2, 1, 3)      # (B,H,S,dh)
    kh = k.reshape(B, 1, num_heads, dh).transpose(0, 2, 1, 3)      # (B,H,1,dh)
    vh = v.reshape(B, 1, num_heads, dh).transpose(0, 2, 1, 3)      # (B,H,1,dh)
    scores = (qh @ kh.transpose(0, 1, 3, 2)) / math.sqrt(dh)       # (B,H,S,1)
    w = jax.nn.softmax(scores, axis=-1)
    attn = (w @ vh).transpose(0, 2, 1, 3).reshape(B, S, Dt)
    attn = attn @ params["wo"] + params["bo"]
    y = t + attn                                                   # dropout: identity (eval)
    return _layernorm(y, params["ln_g"], params["ln_b"])


if __name__ == "__main__":
    # Small shapes consistent with the module; head_dim = 128 keeps every
    # per-head slice lane-aligned on TPU.
    B, S = 2, 8
    TEXT_DIM, VISION_DIM, NUM_HEADS = 512, 256, 4

    root = jax.random.PRNGKey(0)
    ks = jax.random.split(root, 12)

    def linear(key, d_in, d_out):
        kw, kb = jax.random.split(key)
        w = 0.02 * jax.random.normal(kw, (d_in, d_out), jnp.float32)   # stored as W^T: (in, out)
        b = 0.01 * jax.random.normal(kb, (d_out,), jnp.float32)
        return w, b

    wq, bq = linear(ks[0], TEXT_DIM, TEXT_DIM)
    wk, bk = linear(ks[1], VISION_DIM, TEXT_DIM)
    wv, bv = linear(ks[2], VISION_DIM, TEXT_DIM)
    wqi, bqi = linear(ks[3], TEXT_DIM, TEXT_DIM)
    wki, bki = linear(ks[4], TEXT_DIM, TEXT_DIM)
    wvi, bvi = linear(ks[5], TEXT_DIM, TEXT_DIM)
    wo, bo = linear(ks[6], TEXT_DIM, TEXT_DIM)
    params = {
        "wq": wq, "bq": bq, "wk": wk, "bk": bk, "wv": wv, "bv": bv,
        "wq_in": wqi, "bq_in": bqi, "wk_in": wki, "bk_in": bki,
        "wv_in": wvi, "bv_in": bvi, "wo": wo, "bo": bo,
        "ln_g": 1.0 + 0.1 * jax.random.normal(ks[7], (TEXT_DIM,), jnp.float32),
        "ln_b": 0.1 * jax.random.normal(ks[8], (TEXT_DIM,), jnp.float32),
    }

    text = jax.random.normal(ks[9], (B, S, TEXT_DIM), jnp.float32)
    vision = jax.random.normal(ks[10], (B, VISION_DIM), jnp.float32)

    out = cross_attention_layer(text, vision, params, num_heads=NUM_HEADS)
    out = jax.block_until_ready(out)

    ref = reference(text, vision, params, num_heads=NUM_HEADS)
    assert out.shape == (B, S, TEXT_DIM)
    assert jnp.allclose(out, ref, atol=1e-4, rtol=1e-4), "kernel mismatch vs reference"
    print("KERNEL_OK")
</pallas_src>

<mosaic_0001>
module attributes {stable_mosaic.version = 11 : i64} {
  func.func @cross_attention_kernel(%arg0: i32, %arg1: memref<16x512xf32, #tpu.memory_space<vmem>>, %arg2: memref<2x256xf32, #tpu.memory_space<vmem>>, %arg3: memref<256x512xf32, #tpu.memory_space<vmem>>, %arg4: memref<3x512xf32, #tpu.memory_space<vmem>>, %arg5: memref<16x512xf32, #tpu.memory_space<vmem>>) attributes {dimension_semantics = [#tpu.dimension_semantics<parallel>], iteration_bounds = array<i64: 1>, scalar_prefetch = 0 : i64, scratch_operands = 0 : i64, tpu.core_type = #tpu.core_type<tc>, window_params = [{transform_indices = @transform_0, window_bounds = array<i64: 16, 512>}, {pipeline_mode = #tpu.pipeline_mode<synchronous>, transform_indices = @transform_1, window_bounds = array<i64: 2, 256>}, {pipeline_mode = #tpu.pipeline_mode<synchronous>, transform_indices = @transform_2, window_bounds = array<i64: 256, 512>}, {pipeline_mode = #tpu.pipeline_mode<synchronous>, transform_indices = @transform_3, window_bounds = array<i64: 3, 512>}, {transform_indices = @transform_4, window_bounds = array<i64: 16, 512>}]} {
    %c0 = arith.constant 0 : index
    %c0_0 = arith.constant 0 : index
    %0 = vector.load %arg1[%c0, %c0_0] : memref<16x512xf32, #tpu.memory_space<vmem>>, vector<16x512xf32>
    %c0_1 = arith.constant 0 : index
    %c0_2 = arith.constant 0 : index
    %1 = vector.load %arg4[%c0_1, %c0_2] : memref<3x512xf32, #tpu.memory_space<vmem>>, vector<3x512xf32>
    %2 = vector.extract_strided_slice %1 {offsets = [0, 0], sizes = [1, 512], strides = [1, 1]} : vector<3x512xf32> to vector<1x512xf32>
    %3 = vector.extract_strided_slice %1 {offsets = [1, 0], sizes = [1, 512], strides = [1, 1]} : vector<3x512xf32> to vector<1x512xf32>
    %4 = vector.extract_strided_slice %1 {offsets = [2, 0], sizes = [1, 512], strides = [1, 1]} : vector<3x512xf32> to vector<1x512xf32>
    %c0_3 = arith.constant 0 : index
    %c0_4 = arith.constant 0 : index
    %5 = vector.load %arg2[%c0_3, %c0_4] : memref<2x256xf32, #tpu.memory_space<vmem>>, vector<2x256xf32>
    %c0_5 = arith.constant 0 : index
    %c0_6 = arith.constant 0 : index
    %6 = vector.load %arg3[%c0_5, %c0_6] : memref<256x512xf32, #tpu.memory_space<vmem>>, vector<256x512xf32>
    %cst = arith.constant dense<0.000000e+00> : vector<2x512xf32>
    %7 = tpu.matmul %5, %6, %cst {dimension_numbers = #tpu.dot_dimension_numbers<[1], [0], [0], [1], [0, 0, 1, 1], [], []>} : vector<2x256xf32>, vector<256x512xf32>, vector<2x512xf32> -> vector<2x512xf32>
    %8 = vector.broadcast %2 : vector<1x512xf32> to vector<2x512xf32>
    %9 = arith.addf %7, %8 : vector<2x512xf32>
    %c16_i32 = arith.constant 16 : i32
    %10 = arith.muli %arg0, %c16_i32 : i32
    %11 = tpu.iota {dimensions = array<i32: 0>} : vector<16x2xi32>
    %12 = vector.broadcast %10 : i32 to vector<16x2xi32>
    %13 = arith.addi %11, %12 : vector<16x2xi32>
    %14 = tpu.iota {dimensions = array<i32: 1>} : vector<16x2xi32>
    %c8_i32 = arith.constant 8 : i32
    %15 = vector.broadcast %c8_i32 : i32 to vector<16x2xi32>
    %16 = arith.muli %14, %15 : vector<16x2xi32>
    %17 = arith.cmpi sge, %13, %16 : vector<16x2xi32>
    %c8_i32_7 = arith.constant 8 : i32
    %18 = vector.broadcast %c8_i32_7 : i32 to vector<16x2xi32>
    %19 = arith.addi %16, %18 : vector<16x2xi32>
    %20 = arith.cmpi slt, %13, %19 : vector<16x2xi32>
    %21 = arith.andi %17, %20 : vector<16x2xi1>
    %22 = arith.extui %21 : vector<16x2xi1> to vector<16x2xi32>
    %23 = arith.sitofp %22 : vector<16x2xi32> to vector<16x2xf32>
    %cst_8 = arith.constant dense<0.000000e+00> : vector<16x512xf32>
    %24 = tpu.matmul %23, %9, %cst_8 {dimension_numbers = #tpu.dot_dimension_numbers<[1], [0], [0], [1], [0, 0, 1, 1], [], []>} : vector<16x2xf32>, vector<2x512xf32>, vector<16x512xf32> -> vector<16x512xf32>
    %25 = arith.addf %0, %24 : vector<16x512xf32>
    %cst_9 = arith.constant dense<0.000000e+00> : vector<16xf32>
    %26 = vector.multi_reduction <add>, %25, %cst_9 [1] : vector<16x512xf32> to vector<16xf32>
    %27 = vector.shape_cast %26 : vector<16xf32> to vector<16x1xf32>
    %cst_10 = arith.constant 5.120000e+02 : f32
    %28 = vector.broadcast %cst_10 : f32 to vector<16x1xf32>
    %29 = arith.divf %27, %28 : vector<16x1xf32>
    %30 = vector.broadcast %29 : vector<16x1xf32> to vector<16x512xf32>
    %31 = arith.subf %25, %30 : vector<16x512xf32>
    %32 = arith.mulf %31, %31 : vector<16x512xf32>
    %cst_11 = arith.constant dense<0.000000e+00> : vector<16xf32>
    %33 = vector.multi_reduction <add>, %32, %cst_11 [1] : vector<16x512xf32> to vector<16xf32>
    %34 = vector.shape_cast %33 : vector<16xf32> to vector<16x1xf32>
    %cst_12 = arith.constant 5.120000e+02 : f32
    %35 = vector.broadcast %cst_12 : f32 to vector<16x1xf32>
    %36 = arith.divf %34, %35 : vector<16x1xf32>
    %37 = vector.broadcast %29 : vector<16x1xf32> to vector<16x512xf32>
    %38 = arith.subf %25, %37 : vector<16x512xf32>
    %cst_13 = arith.constant 9.99999974E-6 : f32
    %39 = vector.broadcast %cst_13 : f32 to vector<16x1xf32>
    %40 = arith.addf %36, %39 : vector<16x1xf32>
    %41 = math.rsqrt %40 : vector<16x1xf32>
    %42 = vector.broadcast %41 : vector<16x1xf32> to vector<16x512xf32>
    %43 = arith.mulf %38, %42 : vector<16x512xf32>
    %44 = vector.broadcast %3 : vector<1x512xf32> to vector<16x512xf32>
    %45 = arith.mulf %43, %44 : vector<16x512xf32>
    %46 = vector.broadcast %4 : vector<1x512xf32> to vector<16x512xf32>
    %47 = arith.addf %45, %46 : vector<16x512xf32>
    %c0_14 = arith.constant 0 : index
    %c0_15 = arith.constant 0 : index
    %48 = vector.load %arg5[%c0_14, %c0_15] : memref<16x512xf32, #tpu.memory_space<vmem>>, vector<16x512xf32>
    tpu.vector_store %arg5[%c0_14, %c0_15], %47 {strides = array<i32>} : memref<16x512xf32, #tpu.memory_space<vmem>>, vector<16x512xf32>,
    return
  }
  func.func @transform_0(%arg0: i32) -> (i32, i32) {
    %c0_i32 = arith.constant 0 : i32
    %c0_i32_0 = arith.constant 0 : i32
    return %arg0, %c0_i32 : i32, i32
  }
  func.func @transform_1(%arg0: i32) -> (i32, i32) {
    %c0_i32 = arith.constant 0 : i32
    %c0_i32_0 = arith.constant 0 : i32
    %c0_i32_1 = arith.constant 0 : i32
    return %c0_i32, %c0_i32_0 : i32, i32
  }
  func.func @transform_2(%arg0: i32) -> (i32, i32) {
    %c0_i32 = arith.constant 0 : i32
    %c0_i32_0 = arith.constant 0 : i32
    %c0_i32_1 = arith.constant 0 : i32
    return %c0_i32, %c0_i32_0 : i32, i32
  }
  func.func @transform_3(%arg0: i32) -> (i32, i32) {
    %c0_i32 = arith.constant 0 : i32
    %c0_i32_0 = arith.constant 0 : i32
    %c0_i32_1 = arith.constant 0 : i32
    return %c0_i32, %c0_i32_0 : i32, i32
  }
  func.func @transform_4(%arg0: i32) -> (i32, i32) {
    %c0_i32 = arith.constant 0 : i32
    %c0_i32_0 = arith.constant 0 : i32
    return %arg0, %c0_i32 : i32, i32
  }
}

</mosaic_0001>

<llo_original>
// kernel: tpu_custom_call.1
$region0: #{tpu_custom_call.1}
  #allocation0 [shape = 'u32[]', space=smem, size = 0x4, offset = 0x4, fixed_abs, tag = 'smem constant byte address 0x4 - core index']
  #allocation1 [shape = 'u32[144,128]{1,0:T(1,128)}', space=vmem, size = 0x12000, scoped, tag = 'internal scratch']
  %s0 = inlined_call_operand.hbm [shape: f32[16,512], index: 0, kind: input, shape index: {}]
  %s1 = inlined_call_operand.hbm [shape: f32[2,256], index: 1, kind: input, shape index: {}]
  %s2 = inlined_call_operand.hbm [shape: f32[256,512], index: 2, kind: input, shape index: {}]
  %s3 = inlined_call_operand.hbm [shape: f32[3,512], index: 3, kind: input, shape index: {}]
  %s4 = inlined_call_operand.hbm [shape: f32[16,512], index: 4, kind: output, shape index: {}]
  %s5 = sld [smem:[#allocation0]]
  $region42: #{tpu_custom_call.1} parent=0
    _
  %s7 = ssub.s32 1, %s5
  %s8 = scalar_select 0, %s7, %s5
  $region1: #{tpu_custom_call.1} parent=0
    #allocation2 [shape = 'u8[32768]{0}', space=vmem, size = 0x8000, scoped, tag = 'input window, operand 0, single buffered']
    #allocation3 [shape = 's32[1]{0}', space=sflag, size = 0x4, scoped, tag = 'scoped memory for tpu_custom_call.1']
    #allocation4 [shape = 's32[1]{0}', space=sflag, size = 0x4, scoped, tag = 'scoped memory for tpu_custom_call.1']
    #allocation5 [shape = 'u8[2048]{0}', space=vmem, size = 0x800, scoped, tag = 'input window, operand 1, single buffered']
    #allocation6 [shape = 's32[1]{0}', space=sflag, size = 0x4, scoped, tag = 'scoped memory for tpu_custom_call.1']
    #allocation7 [shape = 'u8[524288]{0}', space=vmem, size = 0x80000, scoped, tag = 'input window, operand 2, single buffered']
    #allocation8 [shape = 'u8[8192]{0}', space=vmem, size = 0x2000, scoped, tag = 'input window, operand 3, single buffered']
    #allocation9 [shape = 's32[1]{0}', space=sflag, size = 0x4, scoped, tag = 'scoped memory for tpu_custom_call.1']
    #allocation10 [shape = 'u8[32768]{0}', space=vmem, size = 0x8000, scoped, tag = 'output window, operand 0, single buffered']
    %9 = vsyncpa [#allocation3], 0
    %10 = vsyncpa [#allocation6], 0
    %11 = vsyncpa [#allocation9], 0
    %12 = vsyncpa [#allocation4], 0
    // Predicated region
    $region2: #{tpu_custom_call.1} parent=1 // pred_check
      _
    $region3: #{tpu_custom_call.1} parent=1 // pred_check_branch
      %14 = sbr.rel (0) target = $region5
    $region4: #{tpu_custom_call.1} parent=1 // pred_region
      %s16 = ssub.s32 1024, 1024
      %17 = vsyncadd [#allocation3], %s16
      %s18 = sshll.u32 [#allocation2], 4
      %s19 = int_to_ptr.vmem [resolvable:$true] %s18
      %24 = dma.hbm_to_vmem [thread:$0]  %s0, 1024, %s19, [#allocation3], 512, 512, 32
    $region5: #{tpu_custom_call.1} parent=1 // pred_fallthru
      _
    // Predicated region
    $region6: #{tpu_custom_call.1} parent=1 // pred_check
      _
    $region7: #{tpu_custom_call.1} parent=1 // pred_check_branch
      %26 = sbr.rel (0) target = $region9
    $region8: #{tpu_custom_call.1} parent=1 // pred_region
      %s28 = ssub.s32 64, 64
      %29 = vsyncadd [#allocation6], %s28
      %s31 = sshll.u32 [#allocation5], 4
      %s32 = int_to_ptr.vmem [resolvable:$true] %s31
      %34 = dma.hbm_to_vmem [thread:$0]  %s1, 64, %s32, [#allocation6]
    $region9: #{tpu_custom_call.1} parent=1 // pred_fallthru
      _
    // Predicated region
    $region10: #{tpu_custom_call.1} parent=1 // pred_check
      _
    $region11: #{tpu_custom_call.1} parent=1 // pred_check_branch
      %36 = sbr.rel (0) target = $region13
    $region12: #{tpu_custom_call.1} parent=1 // pred_region
      %s38 = ssub.s32 16384, 16384
      %39 = vsyncadd [#allocation6], %s38
      %s40 = sshll.u32 [#allocation7], 4
      %s41 = int_to_ptr.vmem [resolvable:$true] %s40
      %46 = dma.hbm_to_vmem [thread:$0]  %s2, 16384, %s41, [#allocation6], 512, 512, 32
    $region13: #{tpu_custom_call.1} parent=1 // pred_fallthru
      _
    // Predicated region
    $region14: #{tpu_custom_call.1} parent=1 // pred_check
      _
    $region15: #{tpu_custom_call.1} parent=1 // pred_check_branch
      %48 = sbr.rel (0) target = $region17
    $region16: #{tpu_custom_call.1} parent=1 // pred_region
      %s50 = ssub.s32 256, 256
      %51 = vsyncadd [#allocation9], %s50
      %s53 = sshll.u32 [#allocation8], 4
      %s54 = int_to_ptr.vmem [resolvable:$true] %s53
      %56 = dma.hbm_to_vmem [thread:$0]  %s3, 256, %s54, [#allocation9]
    $region17: #{tpu_custom_call.1} parent=1 // pred_fallthru
      _
    // Predicated region
    $region18: #{tpu_custom_call.1} parent=1 // pred_check
      _
    $region19: #{tpu_custom_call.1} parent=1 // pred_check_branch
      %58 = sbr.rel (0) target = $region21
    $region20: #{tpu_custom_call.1} parent=1 // pred_region
      %59 = dma.done [#allocation3], 1024
    $region21: #{tpu_custom_call.1} parent=1 // pred_fallthru
      _
    // Predicated region
    $region22: #{tpu_custom_call.1} parent=1 // pred_check
      _
    $region23: #{tpu_custom_call.1} parent=1 // pred_check_branch
      %61 = sbr.rel (0) target = $region25
    $region24: #{tpu_custom_call.1} parent=1 // pred_region
      %62 = dma.done [#allocation6], 64
    $region25: #{tpu_custom_call.1} parent=1 // pred_fallthru
      _
    // Predicated region
    $region26: #{tpu_custom_call.1} parent=1 // pred_check
      _
    $region27: #{tpu_custom_call.1} parent=1 // pred_check_branch
      %64 = sbr.rel (0) target = $region29
    $region28: #{tpu_custom_call.1} parent=1 // pred_region
      %65 = dma.done [#allocation6], 16384
    $region29: #{tpu_custom_call.1} parent=1 // pred_fallthru
      _
    // Predicated region
    $region30: #{tpu_custom_call.1} parent=1 // pred_check
      _
    $region31: #{tpu_custom_call.1} parent=1 // pred_check_branch
      %67 = sbr.rel (0) target = $region33
    $region32: #{tpu_custom_call.1} parent=1 // pred_region
      %68 = dma.done [#allocation9], 256
    $region33: #{tpu_custom_call.1} parent=1 // pred_fallthru
      _
    %v69 = vld [vmem:[#allocation2] sm:$0xff]
    %v70 = vld [vmem:[#allocation2 + $0x8] sm:$0xff]
    %v71 = vld [vmem:[#allocation2 + $0x10] sm:$0xff]
    %v72 = vld [vmem:[#allocation2 + $0x18] sm:$0xff]
    %v73 = vld [vmem:[#allocation2 + $0x20] sm:$0xff]
    %v74 = vld [vmem:[#allocation2 + $0x28] sm:$0xff]
    %v75 = vld [vmem:[#allocation2 + $0x30] sm:$0xff]
    %v76 = vld [vmem:[#allocation2 + $0x38] sm:$0xff]
    %v77 = vld [vmem:[#allocation8] sm:$0x77]
    %v78 = vld [vmem:[#allocation8 + $0x8] sm:$0x77]
    %v79 = vld [vmem:[#allocation5] sm:$0xf]
    %v80 = vld [vmem:[#allocation7] sm:$0xff]
    %v81 = vld [vmem:[#allocation7 + $0x8] sm:$0xff]
    %v82 = vld [vmem:[#allocation7 + $0x10] sm:$0xff]
    %v83 = vld [vmem:[#allocation7 + $0x18] sm:$0xff]
    %v84 = vld [vmem:[#allocation7 + $0x20] sm:$0xff]
    %v85 = vld [vmem:[#allocation7 + $0x28] sm:$0xff]
    %v86 = vld [vmem:[#allocation7 + $0x30] sm:$0xff]
    %v87 = vld [vmem:[#allocation7 + $0x38] sm:$0xff]
    %v88 = vld [vmem:[#allocation7 + $0x40] sm:$0xff]
    %v89 = vld [vmem:[#allocation7 + $0x48] sm:$0xff]
    %v90 = vld [vmem:[#allocation7 + $0x50] sm:$0xff]
    %v91 = vld [vmem:[#allocation7 + $0x58] sm:$0xff]
    %v92 = vld [vmem:[#allocation7 + $0x60] sm:$0xff]
    %v93 = vld [vmem:[#allocation7 + $0x68] sm:$0xff]
    %v94 = vld [vmem:[#allocation7 + $0x70] sm:$0xff]
    %v95 = vld [vmem:[#allocation7 + $0x78] sm:$0xff]
    %v96 = vld [vmem:[#allocation7 + $0x80] sm:$0xff]
    %v97 = vld [vmem:[#allocation7 + $0x88] sm:$0xff]
    %v98 = vld [vmem:[#allocation7 + $0x90] sm:$0xff]
    %v99 = vld [vmem:[#allocation7 + $0x98] sm:$0xff]
    %v100 = vld [vmem:[#allocation7 + $0xa0] sm:$0xff]
    %v101 = vld [vmem:[#allocation7 + $0xa8] sm:$0xff]
    %v102 = vld [vmem:[#allocation7 + $0xb0] sm:$0xff]
    %v103 = vld [vmem:[#allocation7 + $0xb8] sm:$0xff]
    %v104 = vld [vmem:[#allocation7 + $0xc0] sm:$0xff]
    %v105 = vld [vmem:[#allocation7 + $0xc8] sm:$0xff]
    %v106 = vld [vmem:[#allocation7 + $0xd0] sm:$0xff]
    %v107 = vld [vmem:[#allocation7 + $0xd8] sm:$0xff]
    %v108 = vld [vmem:[#allocation7 + $0xe0] sm:$0xff]
    %v109 = vld [vmem:[#allocation7 + $0xe8] sm:$0xff]
    %v110 = vld [vmem:[#allocation7 + $0xf0] sm:$0xff]
    %v111 = vld [vmem:[#allocation7 + $0xf8] sm:$0xff]
    %v112 = vld [vmem:[#allocation7 + $0x100] sm:$0xff]
    %v113 = vld [vmem:[#allocation7 + $0x108] sm:$0xff]
    %v114 = vld [vmem:[#allocation7 + $0x110] sm:$0xff]
    %v115 = vld [vmem:[#allocation7 + $0x118] sm:$0xff]
    %v116 = vld [vmem:[#allocation7 + $0x120] sm:$0xff]
    %v117 = vld [vmem:[#allocation7 + $0x128] sm:$0xff]
    %v118 = vld [vmem:[#allocation7 + $0x130] sm:$0xff]
    %v119 = vld [vmem:[#allocation7 + $0x138] sm:$0xff]
    %v120 = vld [vmem:[#allocation7 + $0x140] sm:$0xff]
    %v121 = vld [vmem:[#allocation7 + $0x148] sm:$0xff]
    %v122 = vld [vmem:[#allocation7 + $0x150] sm:$0xff]
    %v123 = vld [vmem:[#allocation7 + $0x158] sm:$0xff]
    %v124 = vld [vmem:[#allocation7 + $0x160] sm:$0xff]
    %v125 = vld [vmem:[#allocation7 + $0x168] sm:$0xff]
    %v126 = vld [vmem:[#allocation7 + $0x170] sm:$0xff]
    %v127 = vld [vmem:[#allocation7 + $0x178] sm:$0xff]
    %v128 = vld [vmem:[#allocation7 + $0x180] sm:$0xff]
    %v129 = vld [vmem:[#allocation7 + $0x188] sm:$0xff]
    %v130 = vld [vmem:[#allocation7 + $0x190] sm:$0xff]
    %v131 = vld [vmem:[#allocation7 + $0x198] sm:$0xff]
    %v132 = vld [vmem:[#allocation7 + $0x1a0] sm:$0xff]
    %v133 = vld [vmem:[#allocation7 + $0x1a8] sm:$0xff]
    %v134 = vld [vmem:[#allocation7 + $0x1b0] sm:$0xff]
    %v135 = vld [vmem:[#allocation7 + $0x1b8] sm:$0xff]
    %v136 = vld [vmem:[#allocation7 + $0x1c0] sm:$0xff]
    %v137 = vld [vmem:[#allocation7 + $0x1c8] sm:$0xff]
    %v138 = vld [vmem:[#allocation7 + $0x1d0] sm:$0xff]
    %v139 = vld [vmem:[#allocation7 + $0x1d8] sm:$0xff]
    %v140 = vld [vmem:[#allocation7 + $0x1e0] sm:$0xff]
    %v141 = vld [vmem:[#allocation7 + $0x1e8] sm:$0xff]
    %v142 = vld [vmem:[#allocation7 + $0x1f0] sm:$0xff]
    %v143 = vld [vmem:[#allocation7 + $0x1f8] sm:$0xff]
    %v144 = vld [vmem:[#allocation7 + $0x200] sm:$0xff]
    %v145 = vld [vmem:[#allocation7 + $0x208] sm:$0xff]
    %v146 = vld [vmem:[#allocation7 + $0x210] sm:$0xff]
    %v147 = vld [vmem:[#allocation7 + $0x218] sm:$0xff]
    %v148 = vld [vmem:[#allocation7 + $0x220] sm:$0xff]
    %v149 = vld [vmem:[#allocation7 + $0x228] sm:$0xff]
    %v150 = vld [vmem:[#allocation7 + $0x230] sm:$0xff]
    %v151 = vld [vmem:[#allocation7 + $0x238] sm:$0xff]
    %v152 = vld [vmem:[#allocation7 + $0x240] sm:$0xff]
    %v153 = vld [vmem:[#allocation7 + $0x248] sm:$0xff]
    %v154 = vld [vmem:[#allocation7 + $0x250] sm:$0xff]
    %v155 = vld [vmem:[#allocation7 + $0x258] sm:$0xff]
    %v156 = vld [vmem:[#allocation7 + $0x260] sm:$0xff]
    %v157 = vld [vmem:[#allocation7 + $0x268] sm:$0xff]
    %v158 = vld [vmem:[#allocation7 + $0x270] sm:$0xff]
    %v159 = vld [vmem:[#allocation7 + $0x278] sm:$0xff]
    %v160 = vld [vmem:[#allocation7 + $0x280] sm:$0xff]
    %v161 = vld [vmem:[#allocation7 + $0x288] sm:$0xff]
    %v162 = vld [vmem:[#allocation7 + $0x290] sm:$0xff]
    %v163 = vld [vmem:[#allocation7 + $0x298] sm:$0xff]
    %v164 = vld [vmem:[#allocation7 + $0x2a0] sm:$0xff]
    %v165 = vld [vmem:[#allocation7 + $0x2a8] sm:$0xff]
    %v166 = vld [vmem:[#allocation7 + $0x2b0] sm:$0xff]
    %v167 = vld [vmem:[#allocation7 + $0x2b8] sm:$0xff]
    %v168 = vld [vmem:[#allocation7 + $0x2c0] sm:$0xff]
    %v169 = vld [vmem:[#allocation7 + $0x2c8] sm:$0xff]
    %v170 = vld [vmem:[#allocation7 + $0x2d0] sm:$0xff]
    %v171 = vld [vmem:[#allocation7 + $0x2d8] sm:$0xff]
    %v172 = vld [vmem:[#allocation7 + $0x2e0] sm:$0xff]
    %v173 = vld [vmem:[#allocation7 + $0x2e8] sm:$0xff]
    %v174 = vld [vmem:[#allocation7 + $0x2f0] sm:$0xff]
    %v175 = vld [vmem:[#allocation7 + $0x2f8] sm:$0xff]
    %v176 = vld [vmem:[#allocation7 + $0x300] sm:$0xff]
    %v177 = vld [vmem:[#allocation7 + $0x308] sm:$0xff]
    %v178 = vld [vmem:[#allocation7 + $0x310] sm:$0xff]
    %v179 = vld [vmem:[#allocation7 + $0x318] sm:$0xff]
    %v180 = vld [vmem:[#allocation7 + $0x320] sm:$0xff]
    %v181 = vld [vmem:[#allocation7 + $0x328] sm:$0xff]
    %v182 = vld [vmem:[#allocation7 + $0x330] sm:$0xff]
    %v183 = vld [vmem:[#allocation7 + $0x338] sm:$0xff]
    %v184 = vld [vmem:[#allocation7 + $0x340] sm:$0xff]
    %v185 = vld [vmem:[#allocation7 + $0x348] sm:$0xff]
    %v186 = vld [vmem:[#allocation7 + $0x350] sm:$0xff]
    %v187 = vld [vmem:[#allocation7 + $0x358] sm:$0xff]
    %v188 = vld [vmem:[#allocation7 + $0x360] sm:$0xff]
    %v189 = vld [vmem:[#allocation7 + $0x368] sm:$0xff]
    %v190 = vld [vmem:[#allocation7 + $0x370] sm:$0xff]
    %v191 = vld [vmem:[#allocation7 + $0x378] sm:$0xff]
    %v192 = vld [vmem:[#allocation7 + $0x380] sm:$0xff]
    %v193 = vld [vmem:[#allocation7 + $0x388] sm:$0xff]
    %v194 = vld [vmem:[#allocation7 + $0x390] sm:$0xff]
    %v195 = vld [vmem:[#allocation7 + $0x398] sm:$0xff]
    %v196 = vld [vmem:[#allocation7 + $0x3a0] sm:$0xff]
    %v197 = vld [vmem:[#allocation7 + $0x3a8] sm:$0xff]
    %v198 = vld [vmem:[#allocation7 + $0x3b0] sm:$0xff]
    %v199 = vld [vmem:[#allocation7 + $0x3b8] sm:$0xff]
    %v200 = vld [vmem:[#allocation7 + $0x3c0] sm:$0xff]
    %v201 = vld [vmem:[#allocation7 + $0x3c8] sm:$0xff]
    %v202 = vld [vmem:[#allocation7 + $0x3d0] sm:$0xff]
    %v203 = vld [vmem:[#allocation7 + $0x3d8] sm:$0xff]
    %v204 = vld [vmem:[#allocation7 + $0x3e0] sm:$0xff]
    %v205 = vld [vmem:[#allocation7 + $0x3e8] sm:$0xff]
    %v206 = vld [vmem:[#allocation7 + $0x3f0] sm:$0xff]
    %v207 = vld [vmem:[#allocation7 + $0x3f8] sm:$0xff]
    %v210 = vlaneseq
    %v211 = vshrl.u32 %v210, 7
    %v212 = vsub.s32 0, %v211
    %v213 = vrot.slane %v77, %v212
    %v214 = vlaneseq
    %v215 = vshrl.u32 %v214, 7
    %v216 = vsub.s32 4, %v215
    %v217 = vrot.slane %v77, %v216
    %v218 = vlaneseq
    %v219 = vshrl.u32 %v218, 7
    %v220 = vsub.s32 0, %v219
    %v221 = vrot.slane %v78, %v220
    %v222 = vlaneseq
    %v223 = vshrl.u32 %v222, 7
    %v224 = vsub.s32 4, %v223
    %v225 = vrot.slane %v78, %v224
    %v230 = vlaneseq
    %v231 = vshrl.u32 %v230, 7
    %v232 = vsub.s32 0, %v231
    %v233 = vrot.slane %v213, %v232
    %v234 = vlaneseq
    %v235 = vshrl.u32 %v234, 7
    %v236 = vsub.s32 0, %v235
    %v237 = vrot.slane %v217, %v236
    %v238 = vlaneseq
    %v239 = vshrl.u32 %v238, 7
    %v240 = vsub.s32 0, %v239
    %v241 = vrot.slane %v221, %v240
    %v242 = vlaneseq
    %v243 = vshrl.u32 %v242, 7
    %v244 = vsub.s32 0, %v243
    %v245 = vrot.slane %v225, %v244
    %v248 = vunpack.c.l.s4 1983009808
    %v249 = vunpack.c.0.s8 %v248
    %v250 = vlaneseq
    %v251 = vshrl.u32 %v250, 7
    %v252 = vsub.s32 %v249, %v251
    %v253 = vrot.slane %v79, %v252
    %v254 = vcombine.high %v253, %v253
    %257 = vmatprep.subr.mxu0 %v141
    %258 = vmatpush1.msra.mxu0 %v140
    %259 = vmatprep.subr.mxu0 %v137
    %260 = vmatpush1.msra.mxu0 %v136
    %261 = vmatprep.subr.mxu0 %v133
    %262 = vmatpush1.msra.mxu0 %v132
    %263 = vmatprep.subr.mxu0 %v129
    %264 = vmatpush1.msra.mxu0 %v128
    %265 = vmatprep.subr.mxu0 %v125
    %266 = vmatpush1.msra.mxu0 %v124
    %267 = vmatprep.subr.mxu0 %v121
    %268 = vmatpush1.msra.mxu0 %v120
    %269 = vmatprep.subr.mxu0 %v117
    %270 = vmatpush1.msra.mxu0 %v116
    %271 = vmatprep.subr.mxu0 %v113
    %272 = vmatpush1.msra.mxu0 %v112
    %273 = vmatprep.subr.mxu0 %v109
    %274 = vmatpush1.msra.mxu0 %v108
    %275 = vmatprep.subr.mxu0 %v105
    %276 = vmatpush1.msra.mxu0 %v104
    %277 = vmatprep.subr.mxu0 %v101
    %278 = vmatpush1.msra.mxu0 %v100
    %279 = vmatprep.subr.mxu0 %v97
    %280 = vmatpush1.msra.mxu0 %v96
    %281 = vmatprep.subr.mxu0 %v93
    %282 = vmatpush1.msra.mxu0 %v92
    %283 = vmatprep.subr.mxu0 %v89
    %284 = vmatpush1.msra.mxu0 %v88
    %285 = vmatprep.subr.mxu0 %v85
    %286 = vmatpush1.msra.mxu0 %v84
    %287 = vmatprep.subr.mxu0 %v81
    %288 = vmatpush1.msra.mxu0 %v80
    %289 = vmatprep.subr.mxu0 %v205
    %290 = vmatpush2.msra.mxu0 %v204
    %291 = vmatprep.subr.mxu0 %v201
    %292 = vmatpush2.msra.mxu0 %v200
    %293 = vmatprep.subr.mxu0 %v197
    %294 = vmatpush2.msra.mxu0 %v196
    %295 = vmatprep.subr.mxu0 %v193
    %296 = vmatpush2.msra.mxu0 %v192
    %297 = vmatprep.subr.mxu0 %v189
    %298 = vmatpush2.msra.mxu0 %v188
    %299 = vmatprep.subr.mxu0 %v185
    %300 = vmatpush2.msra.mxu0 %v184
    %301 = vmatprep.subr.mxu0 %v181
    %302 = vmatpush2.msra.mxu0 %v180
    %303 = vmatprep.subr.mxu0 %v177
    %304 = vmatpush2.msra.mxu0 %v176
    %305 = vmatprep.subr.mxu0 %v173
    %306 = vmatpush2.msra.mxu0 %v172
    %307 = vmatprep.subr.mxu0 %v169
    %308 = vmatpush2.msra.mxu0 %v168
    %309 = vmatprep.subr.mxu0 %v165
    %310 = vmatpush2.msra.mxu0 %v164
    %311 = vmatprep.subr.mxu0 %v161
    %312 = vmatpush2.msra.mxu0 %v160
    %313 = vmatprep.subr.mxu0 %v157
    %314 = vmatpush2.msra.mxu0 %v156
    %315 = vmatprep.subr.mxu0 %v153
    %316 = vmatpush2.msra.mxu0 %v152
    %317 = vmatprep.subr.mxu0 %v149
    %318 = vmatpush2.msra.mxu0 %v148
    %319 = vmatprep.subr.mxu0 %v145
    %320 = vmatpush2.msra.mxu0 %v144
    %321 = vmatprep.mubr.f32.mxu0 %v254
    %322 = vmatmul.mubr.f32.gmra.mxu0 %v253
    %v323 = vpop.f32.mrf.mxu0
    %v324 = vadd.f32 %v233, %v323
    %v325 = vpop.f32.mrf.mxu0
    %v326 = vadd.f32 %v237, %v325
    %327 = vdwg.mxu0
    %328 = vmatprep.subr.mxu0 %v143
    %329 = vmatpush1.msra.mxu0 %v142
    %330 = vmatprep.subr.mxu0 %v139
    %331 = vmatpush1.msra.mxu0 %v138
    %332 = vmatprep.subr.mxu0 %v135
    %333 = vmatpush1.msra.mxu0 %v134
    %334 = vmatprep.subr.mxu0 %v131
    %335 = vmatpush1.msra.mxu0 %v130
    %336 = vmatprep.subr.mxu0 %v127
    %337 = vmatpush1.msra.mxu0 %v126
    %338 = vmatprep.subr.mxu0 %v123
    %339 = vmatpush1.msra.mxu0 %v122
    %340 = vmatprep.subr.mxu0 %v119
    %341 = vmatpush1.msra.mxu0 %v118
    %342 = vmatprep.subr.mxu0 %v115
    %343 = vmatpush1.msra.mxu0 %v114
    %344 = vmatprep.subr.mxu0 %v111
    %345 = vmatpush1.msra.mxu0 %v110
    %346 = vmatprep.subr.mxu0 %v107
    %347 = vmatpush1.msra.mxu0 %v106
    %348 = vmatprep.subr.mxu0 %v103
    %349 = vmatpush1.msra.mxu0 %v102
    %350 = vmatprep.subr.mxu0 %v99
    %351 = vmatpush1.msra.mxu0 %v98
    %352 = vmatprep.subr.mxu0 %v95
    %353 = vmatpush1.msra.mxu0 %v94
    %354 = vmatprep.subr.mxu0 %v91
    %355 = vmatpush1.msra.mxu0 %v90
    %356 = vmatprep.subr.mxu0 %v87
    %357 = vmatpush1.msra.mxu0 %v86
    %358 = vmatprep.subr.mxu0 %v83
    %359 = vmatpush1.msra.mxu0 %v82
    %360 = vmatprep.subr.mxu0 %v207
    %361 = vmatpush2.msra.mxu0 %v206
    %362 = vmatprep.subr.mxu0 %v203
    %363 = vmatpush2.msra.mxu0 %v202
    %364 = vmatprep.subr.mxu0 %v199
    %365 = vmatpush2.msra.mxu0 %v198
    %366 = vmatprep.subr.mxu0 %v195
    %367 = vmatpush2.msra.mxu0 %v194
    %368 = vmatprep.subr.mxu0 %v191
    %369 = vmatpush2.msra.mxu0 %v190
    %370 = vmatprep.subr.mxu0 %v187
    %371 = vmatpush2.msra.mxu0 %v186
    %372 = vmatprep.subr.mxu0 %v183
    %373 = vmatpush2.msra.mxu0 %v182
    %374 = vmatprep.subr.mxu0 %v179
    %375 = vmatpush2.msra.mxu0 %v178
    %376 = vmatprep.subr.mxu0 %v175
    %377 = vmatpush2.msra.mxu0 %v174
    %378 = vmatprep.subr.mxu0 %v171
    %379 = vmatpush2.msra.mxu0 %v170
    %380 = vmatprep.subr.mxu0 %v167
    %381 = vmatpush2.msra.mxu0 %v166
    %382 = vmatprep.subr.mxu0 %v163
    %383 = vmatpush2.msra.mxu0 %v162
    %384 = vmatprep.subr.mxu0 %v159
    %385 = vmatpush2.msra.mxu0 %v158
    %386 = vmatprep.subr.mxu0 %v155
    %387 = vmatpush2.msra.mxu0 %v154
    %388 = vmatprep.subr.mxu0 %v151
    %389 = vmatpush2.msra.mxu0 %v150
    %390 = vmatprep.subr.mxu0 %v147
    %391 = vmatpush2.msra.mxu0 %v146
    %392 = vmatprep.mubr.f32.mxu0 %v254
    %393 = vmatmul.mubr.f32.gmra.mxu0 %v253
    %v394 = vpop.f32.mrf.mxu0
    %v395 = vadd.f32 %v241, %v394
    %v396 = vpop.f32.mrf.mxu0
    %v397 = vadd.f32 %v245, %v396
    %398 = vdwg.mxu0
    %s399 = smul.u32 0, 16
    %v400 = vlaneseq
    %v401 = vshrl.u32 %v400, 7
    %v402 = vadd.s32 %v401, 8
    %v403 = vstv %s399
    %v404 = vadd.s32 %v401, %v403
    %v405 = vadd.s32 %v402, %v403
    %v406 = vlaneseq
    %v407 = vand.u32 %v406, 127
    %v408 = vmul.u32 %v407, 8
    %vm409 = vcmp.ge.s32.totalorder %v404, %v408
    %vm410 = vcmp.ge.s32.totalorder %v405, %v408
    %v411 = vadd.s32 %v408, 8
    %vm412 = vcmp.lt.s32.totalorder %v404, %v411
    %vm413 = vcmp.lt.s32.totalorder %v405, %v411
    %vm414 = vmand %vm409, %vm412
    %vm415 = vmand %vm410, %vm413
    %v416 = vsel %vm414, 1, 0
    %v417 = vsel %vm415, 1, 0
    %v418 = vcvt.s32.f32 %v416
    %v419 = vcvt.s32.f32 %v417
    %vm420 = vcmask 15360
    %v422 = vsel %vm420, %v418, 0
    %v425 = vsel %vm420, %v419, 0
    %vm427 = vcmask 1041408
    %v429 = vsel %vm427, %v324, 0
    %v432 = vsel %vm427, %v326, 0
    %v435 = vsel %vm427, %v395, 0
    %v438 = vsel %vm427, %v397, 0
    %440 = vmatprep.subr.mxu0 0.0
    %441 = vmatpush1.msra.mxu0 0.0
    %442 = vmatprep.subr.mxu0 0.0
    %443 = vmatpush1.msra.mxu0 0.0
    %444 = vmatprep.subr.mxu0 0.0
    %445 = vmatpush1.msra.mxu0 0.0
    %446 = vmatprep.subr.mxu0 0.0
    %447 = vmatpush1.msra.mxu0 0.0
    %448 = vmatprep.subr.mxu0 0.0
    %449 = vmatpush1.msra.mxu0 0.0
    %450 = vmatprep.subr.mxu0 0.0
    %451 = vmatpush1.msra.mxu0 0.0
    %452 = vmatprep.subr.mxu0 0.0
    %453 = vmatpush1.msra.mxu0 0.0
    %454 = vmatprep.subr.mxu0 0.0
    %455 = vmatpush1.msra.mxu0 0.0
    %456 = vmatprep.subr.mxu0 0.0
    %457 = vmatpush1.msra.mxu0 0.0
    %458 = vmatprep.subr.mxu0 0.0
    %459 = vmatpush1.msra.mxu0 0.0
    %460 = vmatprep.subr.mxu0 0.0
    %461 = vmatpush1.msra.mxu0 0.0
    %462 = vmatprep.subr.mxu0 0.0
    %463 = vmatpush1.msra.mxu0 0.0
    %464 = vmatprep.subr.mxu0 0.0
    %465 = vmatpush1.msra.mxu0 0.0
    %466 = vmatprep.subr.mxu0 0.0
    %467 = vmatpush1.msra.mxu0 0.0
    %468 = vmatprep.subr.mxu0 0.0
    %469 = vmatpush1.msra.mxu0 0.0
    %470 = vmatprep.subr.mxu0 %v432
    %471 = vmatpush1.msra.mxu0 %v429
    %472 = vmatprep.subr.mxu0 0.0
    %473 = vmatpush2.msra.mxu0 0.0
    %474 = vmatprep.subr.mxu0 0.0
    %475 = vmatpush2.msra.mxu0 0.0
    %476 = vmatprep.subr.mxu0 0.0
    %477 = vmatpush2.msra.mxu0 0.0
    %478 = vmatprep.subr.mxu0 0.0
    %479 = vmatpush2.msra.mxu0 0.0
    %480 = vmatprep.subr.mxu0 0.0
    %481 = vmatpush2.msra.mxu0 0.0
    %482 = vmatprep.subr.mxu0 0.0
    %483 = vmatpush2.msra.mxu0 0.0
    %484 = vmatprep.subr.mxu0 0.0
    %485 = vmatpush2.msra.mxu0 0.0
    %486 = vmatprep.subr.mxu0 0.0
    %487 = vmatpush2.msra.mxu0 0.0
    %488 = vmatprep.subr.mxu0 0.0
    %489 = vmatpush2.msra.mxu0 0.0
    %490 = vmatprep.subr.mxu0 0.0
    %491 = vmatpush2.msra.mxu0 0.0
    %492 = vmatprep.subr.mxu0 0.0
    %493 = vmatpush2.msra.mxu0 0.0
    %494 = vmatprep.subr.mxu0 0.0
    %495 = vmatpush2.msra.mxu0 0.0
    %496 = vmatprep.subr.mxu0 0.0
    %497 = vmatpush2.msra.mxu0 0.0
    %498 = vmatprep.subr.mxu0 0.0
    %499 = vmatpush2.msra.mxu0 0.0
    %500 = vmatprep.subr.mxu0 0.0
    %501 = vmatpush2.msra.mxu0 0.0
    %502 = vmatprep.subr.mxu0 0.0
    %503 = vmatpush2.msra.mxu0 0.0
    %504 = vmatprep.mubr.f32.mxu0 0.0
    %505 = vmatmul.mubr.f32.gmra.mxu0 %v422
    %v506 = vpop.f32.mrf.mxu0
    %v507 = vadd.f32 0.0, %v506
    %v508 = vpop.f32.mrf.mxu0
    %v509 = vadd.f32 0.0, %v508
    %510 = vmatprep.mubr.f32.mxu0 0.0
    %511 = vmatmul.mubr.f32.gmra.mxu0 %v425
    %v512 = vpop.f32.mrf.mxu0
    %v513 = vadd.f32 0.0, %v512
    %v514 = vpop.f32.mrf.mxu0
    %v515 = vadd.f32 0.0, %v514
    %516 = vdwg.mxu0
    %517 = vmatprep.subr.mxu0 0.0
    %518 = vmatpush1.msra.mxu0 0.0
    %519 = vmatprep.subr.mxu0 0.0
    %520 = vmatpush1.msra.mxu0 0.0
    %521 = vmatprep.subr.mxu0 0.0
    %522 = vmatpush1.msra.mxu0 0.0
    %523 = vmatprep.subr.mxu0 0.0
    %524 = vmatpush1.msra.mxu0 0.0
    %525 = vmatprep.subr.mxu0 0.0
    %526 = vmatpush1.msra.mxu0 0.0
    %527 = vmatprep.subr.mxu0 0.0
    %528 = vmatpush1.msra.mxu0 0.0
    %529 = vmatprep.subr.mxu0 0.0
    %530 = vmatpush1.msra.mxu0 0.0
    %531 = vmatprep.subr.mxu0 0.0
    %532 = vmatpush1.msra.mxu0 0.0
    %533 = vmatprep.subr.mxu0 0.0
    %534 = vmatpush1.msra.mxu0 0.0
    %535 = vmatprep.subr.mxu0 0.0
    %536 = vmatpush1.msra.mxu0 0.0
    %537 = vmatprep.subr.mxu0 0.0
    %538 = vmatpush1.msra.mxu0 0.0
    %539 = vmatprep.subr.mxu0 0.0
    %540 = vmatpush1.msra.mxu0 0.0
    %541 = vmatprep.subr.mxu0 0.0
    %542 = vmatpush1.msra.mxu0 0.0
    %543 = vmatprep.subr.mxu0 0.0
    %544 = vmatpush1.msra.mxu0 0.0
    %545 = vmatprep.subr.mxu0 0.0
    %546 = vmatpush1.msra.mxu0 0.0
    %547 = vmatprep.subr.mxu0 %v438
    %548 = vmatpush1.msra.mxu0 %v435
    %549 = vmatprep.subr.mxu0 0.0
    %550 = vmatpush2.msra.mxu0 0.0
    %551 = vmatprep.subr.mxu0 0.0
    %552 = vmatpush2.msra.mxu0 0.0
    %553 = vmatprep.subr.mxu0 0.0
    %554 = vmatpush2.msra.mxu0 0.0
    %555 = vmatprep.subr.mxu0 0.0
    %556 = vmatpush2.msra.mxu0 0.0
    %557 = vmatprep.subr.mxu0 0.0
    %558 = vmatpush2.msra.mxu0 0.0
    %559 = vmatprep.subr.mxu0 0.0
    %560 = vmatpush2.msra.mxu0 0.0
    %561 = vmatprep.subr.mxu0 0.0
    %562 = vmatpush2.msra.mxu0 0.0
    %563 = vmatprep.subr.mxu0 0.0
    %564 = vmatpush2.msra.mxu0 0.0
    %565 = vmatprep.subr.mxu0 0.0
    %566 = vmatpush2.msra.mxu0 0.0
    %567 = vmatprep.subr.mxu0 0.0
    %568 = vmatpush2.msra.mxu0 0.0
    %569 = vmatprep.subr.mxu0 0.0
    %570 = vmatpush2.msra.mxu0 0.0
    %571 = vmatprep.subr.mxu0 0.0
    %572 = vmatpush2.msra.mxu0 0.0
    %573 = vmatprep.subr.mxu0 0.0
    %574 = vmatpush2.msra.mxu0 0.0
    %575 = vmatprep.subr.mxu0 0.0
    %576 = vmatpush2.msra.mxu0 0.0
    %577 = vmatprep.subr.mxu0 0.0
    %578 = vmatpush2.msra.mxu0 0.0
    %579 = vmatprep.subr.mxu0 0.0
    %580 = vmatpush2.msra.mxu0 0.0
    %581 = vmatprep.mubr.f32.mxu0 0.0
    %582 = vmatmul.mubr.f32.gmra.mxu0 %v422
    %v583 = vpop.f32.mrf.mxu0
    %v584 = vadd.f32 0.0, %v583
    %v585 = vpop.f32.mrf.mxu0
    %v586 = vadd.f32 0.0, %v585
    %587 = vmatprep.mubr.f32.mxu0 0.0
    %588 = vmatmul.mubr.f32.gmra.mxu0 %v425
    %v589 = vpop.f32.mrf.mxu0
    %v590 = vadd.f32 0.0, %v589
    %v591 = vpop.f32.mrf.mxu0
    %v592 = vadd.f32 0.0, %v591
    %593 = vdwg.mxu0
    %v594 = vadd.f32 %v69, %v507
    %v595 = vadd.f32 %v70, %v509
    %v596 = vadd.f32 %v71, %v584
    %v597 = vadd.f32 %v72, %v586
    %v598 = vadd.f32 %v73, %v513
    %v599 = vadd.f32 %v74, %v515
    %v600 = vadd.f32 %v75, %v590
    %v601 = vadd.f32 %v76, %v592
    %v602 = vadd.f32 %v594, %v595
    %v603 = vadd.f32 %v602, %v596
    %v604 = vadd.f32 %v603, %v597
    %605 = vadd.xlane.f32.xlu0 %v604
    %v606 = vpop.xlane.xlu0 %605
    %v607 = vadd.f32 %v598, %v599
    %v608 = vadd.f32 %v607, %v600
    %v609 = vadd.f32 %v608, %v601
    %610 = vadd.xlane.f32.xlu0 %v609
    %v611 = vpop.xlane.xlu0 %610
    %v612 = vrcp.pop 512.0
    %v613 = vmul.f32 %v606, %v612
    %v614 = vmul.f32 %v611, %v612
    %v615 = vsub.f32 %v594, %v613
    %v616 = vsub.f32 %v595, %v613
    %v617 = vsub.f32 %v596, %v613
    %v618 = vsub.f32 %v597, %v613
    %v619 = vsub.f32 %v598, %v614
    %v620 = vsub.f32 %v599, %v614
    %v621 = vsub.f32 %v600, %v614
    %v622 = vsub.f32 %v601, %v614
    %v623 = vmul.f32 %v615, %v615
    %v624 = vmul.f32 %v616, %v616
    %v625 = vmul.f32 %v617, %v617
    %v626 = vmul.f32 %v618, %v618
    %v627 = vmul.f32 %v619, %v619
    %v628 = vmul.f32 %v620, %v620
    %v629 = vmul.f32 %v621, %v621
    %v630 = vmul.f32 %v622, %v622
    %v631 = vadd.f32 %v623, %v624
    %v632 = vadd.f32 %v631, %v625
    %v633 = vadd.f32 %v632, %v626
    %634 = vadd.xlane.f32.xlu0 %v633
    %v635 = vpop.xlane.xlu0 %634
    %v636 = vadd.f32 %v627, %v628
    %v637 = vadd.f32 %v636, %v629
    %v638 = vadd.f32 %v637, %v630
    %639 = vadd.xlane.f32.xlu0 %v638
    %v640 = vpop.xlane.xlu0 %639
    %v641 = vmul.f32 %v635, %v612
    %v642 = vmul.f32 %v640, %v612
    %v643 = vadd.f32 %v641, 1e-05
    %v644 = vadd.f32 %v642, 1e-05
    %v645 = vrsqrt.pop %v643
    %v646 = vrsqrt.pop %v644
    %v647 = vmul.f32 %v615, %v645
    %v648 = vmul.f32 %v616, %v645
    %v649 = vmul.f32 %v617, %v645
    %v650 = vmul.f32 %v618, %v645
    %v651 = vmul.f32 %v619, %v646
    %v652 = vmul.f32 %v620, %v646
    %v653 = vmul.f32 %v621, %v646
    %v654 = vmul.f32 %v622, %v646
    %v655 = vlaneseq
    %v656 = vshrl.u32 %v655, 7
    %v657 = vsub.s32 1, %v656
    %v658 = vrot.slane %v77, %v657
    %v659 = vlaneseq
    %v660 = vshrl.u32 %v659, 7
    %v661 = vsub.s32 5, %v660
    %v662 = vrot.slane %v77, %v661
    %v663 = vlaneseq
    %v664 = vshrl.u32 %v663, 7
    %v665 = vsub.s32 1, %v664
    %v666 = vrot.slane %v78, %v665
    %v667 = vlaneseq
    %v668 = vshrl.u32 %v667, 7
    %v669 = vsub.s32 5, %v668
    %v670 = vrot.slane %v78, %v669
    %v675 = vlaneseq
    %v676 = vshrl.u32 %v675, 7
    %v677 = vsub.s32 1, %v676
    %v678 = vrot.slane %v658, %v677
    %v679 = vlaneseq
    %v680 = vshrl.u32 %v679, 7
    %v681 = vsub.s32 1, %v680
    %v682 = vrot.slane %v662, %v681
    %v683 = vlaneseq
    %v684 = vshrl.u32 %v683, 7
    %v685 = vsub.s32 1, %v684
    %v686 = vrot.slane %v666, %v685
    %v687 = vlaneseq
    %v688 = vshrl.u32 %v687, 7
    %v689 = vsub.s32 1, %v688
    %v690 = vrot.slane %v670, %v689
    %v691 = vmul.f32 %v647, %v678
    %v692 = vmul.f32 %v648, %v682
    %v693 = vmul.f32 %v649, %v686
    %v694 = vmul.f32 %v650, %v690
    %v695 = vmul.f32 %v651, %v678
    %v696 = vmul.f32 %v652, %v682
    %v697 = vmul.f32 %v653, %v686
    %v698 = vmul.f32 %v654, %v690
    %v699 = vlaneseq
    %v700 = vshrl.u32 %v699, 7
    %v701 = vsub.s32 2, %v700
    %v702 = vrot.slane %v77, %v701
    %v703 = vlaneseq
    %v704 = vshrl.u32 %v703, 7
    %v705 = vsub.s32 6, %v704
    %v706 = vrot.slane %v77, %v705
    %v707 = vlaneseq
    %v708 = vshrl.u32 %v707, 7
    %v709 = vsub.s32 2, %v708
    %v710 = vrot.slane %v78, %v709
    %v711 = vlaneseq
    %v712 = vshrl.u32 %v711, 7
    %v713 = vsub.s32 6, %v712
    %v714 = vrot.slane %v78, %v713
    %v719 = vlaneseq
    %v720 = vshrl.u32 %v719, 7
    %v721 = vsub.s32 2, %v720
    %v722 = vrot.slane %v702, %v721
    %v723 = vlaneseq
    %v724 = vshrl.u32 %v723, 7
    %v725 = vsub.s32 2, %v724
    %v726 = vrot.slane %v706, %v725
    %v727 = vlaneseq
    %v728 = vshrl.u32 %v727, 7
    %v729 = vsub.s32 2, %v728
    %v730 = vrot.slane %v710, %v729
    %v731 = vlaneseq
    %v732 = vshrl.u32 %v731, 7
    %v733 = vsub.s32 2, %v732
    %v734 = vrot.slane %v714, %v733
    %v735 = vadd.f32 %v691, %v722
    %v736 = vadd.f32 %v692, %v726
    %v737 = vadd.f32 %v693, %v730
    %v738 = vadd.f32 %v694, %v734
    %v739 = vadd.f32 %v695, %v722
    %v740 = vadd.f32 %v696, %v726
    %v741 = vadd.f32 %v697, %v730
    %v742 = vadd.f32 %v698, %v734
    %743 = vst [vmem:[#allocation10] sm:$0xff] %v735
    %744 = vst [vmem:[#allocation10 + $0x8] sm:$0xff] %v736
    %745 = vst [vmem:[#allocation10 + $0x10] sm:$0xff] %v737
    %746 = vst [vmem:[#allocation10 + $0x18] sm:$0xff] %v738
    %747 = vst [vmem:[#allocation10 + $0x20] sm:$0xff] %v739
    %748 = vst [vmem:[#allocation10 + $0x28] sm:$0xff] %v740
    %749 = vst [vmem:[#allocation10 + $0x30] sm:$0xff] %v741
    %750 = vst [vmem:[#allocation10 + $0x38] sm:$0xff] %v742
    // Predicated region
    $region34: #{tpu_custom_call.1} parent=1 // pred_check
      _
    $region35: #{tpu_custom_call.1} parent=1 // pred_check_branch
      %752 = sbr.rel (0) target = $region37
    $region36: #{tpu_custom_call.1} parent=1 // pred_region
      %s754 = ssub.s32 1024, 1024
      %755 = vsyncadd [#allocation4], %s754
      %s756 = sshll.u32 [#allocation10], 4
      %s757 = int_to_ptr.vmem [resolvable:$true] %s756
      %762 = dma.vmem_to_hbm [thread:$0]  %s757, 1024, %s4, [#allocation4], 512, 512, 32
    $region37: #{tpu_custom_call.1} parent=1 // pred_fallthru
      _
    // Predicated region
    $region38: #{tpu_custom_call.1} parent=1 // pred_check
      _
    $region39: #{tpu_custom_call.1} parent=1 // pred_check_branch
      %764 = sbr.rel (0) target = $region41
    $region40: #{tpu_custom_call.1} parent=1 // pred_region
      %765 = dma.done [#allocation4], 1024
    $region41: #{tpu_custom_call.1} parent=1 // pred_fallthru
      _
    %766 = vsyncpa [#allocation3], 1
    %767 = vsyncpa [#allocation6], 1
    %768 = vsyncpa [#allocation9], 1
    %769 = vsyncpa [#allocation4], 1

</llo_original>
